<compile_context>
chip_gen: v6e
topology: v6e:2x2x1
jax: 0.10.0
libtpu: 0.0.40
codegen_flags: <defaults>
</compile_context>

<pallas_src>
import jax
import jax.numpy as jnp
from jax.experimental import pallas as pl
from jax.experimental.pallas import tpu as pltpu


def to_2tuple(v):
    return tuple(v) if isinstance(v, (tuple, list)) else (v, v)


def _round_up(x, m):
    return (x + m - 1) // m * m


def _patch_embed_matmul_kernel(a_ref, w_ref, b_ref, o_ref, acc_ref):
    # a_ref: (tm, tk) patches tile; w_ref: (tk, tn) weight tile
    # b_ref: (1, tn) bias tile;     o_ref: (tm, tn) output tile
    # acc_ref: (tm, tn) f32 accumulator, resident across the K reduction axis.
    k = pl.program_id(2)

    @pl.when(k == 0)
    def _():
        acc_ref[...] = jnp.zeros_like(acc_ref)

    acc_ref[...] += jnp.dot(a_ref[...], w_ref[...],
                            preferred_element_type=jnp.float32)

    @pl.when(k == pl.num_programs(2) - 1)
    def _():
        o_ref[...] = (acc_ref[...] + b_ref[...].astype(jnp.float32)).astype(o_ref.dtype)


def _gemm_bias(a, w, bias, out_dtype):
    """out = a @ w + bias via a tiled Pallas MXU matmul.

    a: (M, K), w: (K, N), bias: (N,). Inputs are zero-padded up to tile
    multiples (zero K-padding does not change the result; extra M/N rows and
    columns are sliced off)."""
    M, K = a.shape
    K2, N = w.shape
    assert K == K2

    # Large, lane-dense, (8,128)-aligned tiles; clamp to the (padded) problem.
    tm = min(256, _round_up(M, 8))
    tn = min(256, _round_up(N, 128))
    tk = min(512, _round_up(K, 128))

    Mp, Np, Kp = _round_up(M, tm), _round_up(N, tn), _round_up(K, tk)
    a_p = jnp.pad(a, ((0, Mp - M), (0, Kp - K)))
    w_p = jnp.pad(w, ((0, Kp - K), (0, Np - N)))
    b_p = jnp.pad(bias.reshape(1, N).astype(jnp.float32), ((0, 0), (0, Np - N)))

    grid = (Mp // tm, Np // tn, Kp // tk)  # reduction axis last

    out_p = pl.pallas_call(
        _patch_embed_matmul_kernel,
        out_shape=jax.ShapeDtypeStruct((Mp, Np), out_dtype),
        grid_spec=pltpu.PrefetchScalarGridSpec(
            num_scalar_prefetch=0,
            grid=grid,
            in_specs=[
                pl.BlockSpec((tm, tk), lambda i, j, k: (i, k)),   # patches
                pl.BlockSpec((tk, tn), lambda i, j, k: (k, j)),   # weight
                pl.BlockSpec((1, tn), lambda i, j, k: (0, j)),    # bias
            ],
            out_specs=pl.BlockSpec((tm, tn), lambda i, j, k: (i, j)),
            scratch_shapes=[pltpu.VMEM((tm, tn), jnp.float32)],
        ),
        compiler_params=pltpu.CompilerParams(
            dimension_semantics=("parallel", "parallel", "arbitrary")),
    )(a_p, w_p, b_p)

    return out_p[:M, :N]


def patch_embed_forward(x, weight, bias, patch_size, tubelet_size):
    """x: (B, C, T, H, W); weight: (E, C, t, ph, pw); bias: (E,) -> (B, P, E)."""
    B, C, T, H, W = x.shape
    E = weight.shape[0]
    t = int(tubelet_size)
    ph, pw = patch_size
    Tt, Hh, Ww = T // t, H // ph, W // pw
    P = Tt * Hh * Ww
    K = C * t * ph * pw

    # Patch extraction: pure layout transform (no FLOPs), kept in the wrapper.
    # TODO(synk): this reshape/transpose could be folded into the kernel via
    # Element-indexed BlockSpecs, but it is layout plumbing, not compute.
    xp = x.reshape(B, C, Tt, t, Hh, ph, Ww, pw)
    xp = xp.transpose(0, 2, 4, 6, 1, 3, 5, 7)       # (B, Tt, Hh, Ww, C, t, ph, pw)
    a = xp.reshape(B * P, K)                         # K flattened as (C, t, ph, pw)

    w = weight.reshape(E, K).T                       # (K, E), same (C,t,ph,pw) order
    out = _gemm_bias(a, w, bias, x.dtype)            # (B*P, E)
    return out.reshape(B, P, E)


class PatchEmbed:
    """Image/video to Patch Embedding — JAX/Pallas port of the PyTorch module."""

    def __init__(self, img_size=224, patch_size=16, in_chans=3, embed_dim=768,
                 num_frames=16, tubelet_size=2, *, key=None, dtype=jnp.float32):
        img_size = to_2tuple(img_size)
        patch_size = to_2tuple(patch_size)
        self.tubelet_size = int(tubelet_size)
        self.img_size = img_size
        self.patch_size = patch_size
        self.in_chans = in_chans
        self.embed_dim = embed_dim
        self.num_patches = (img_size[1] // patch_size[1]) * \
                           (img_size[0] // patch_size[0]) * \
                           (num_frames // self.tubelet_size)

        if key is None:
            key = jax.random.PRNGKey(0)
        kw, kb = jax.random.split(key)
        # Conv3d parameter layout matches PyTorch: (out_ch, in_ch, t, ph, pw).
        self.weight = 0.02 * jax.random.normal(
            kw, (embed_dim, in_chans, self.tubelet_size, patch_size[0], patch_size[1]),
            dtype=dtype)
        self.bias = 0.02 * jax.random.normal(kb, (embed_dim,), dtype=dtype)

    def __call__(self, x, **kwargs):
        B, C, T, H, W = x.shape
        assert H == self.img_size[0] and W == self.img_size[1], (
            f"Input image size ({H}*{W}) doesn't match model "
            f"({self.img_size[0]}*{self.img_size[1]}).")
        return patch_embed_forward(x, self.weight, self.bias,
                                   self.patch_size, self.tubelet_size)


if __name__ == "__main__":
    key = jax.random.PRNGKey(0)
    kx, kp = jax.random.split(key)

    # Small shapes: B=2, C=3, T=4 frames, 16x16 images, 8x8 patches,
    # tubelet 2, embed_dim 128 -> 8 patches per sample.
    B, C, T, Hs, Ws = 2, 3, 4, 16, 16
    mod = PatchEmbed(img_size=16, patch_size=8, in_chans=C, embed_dim=128,
                     num_frames=T, tubelet_size=2, key=kp)

    x = jax.random.normal(kx, (B, C, T, Hs, Ws), dtype=jnp.float32)

    y = jax.block_until_ready(mod(x))
    assert y.shape == (B, mod.num_patches, mod.embed_dim), y.shape

    # Pure-JAX reference: the actual strided Conv3d + bias + flatten + transpose.
    ref_conv = jax.lax.conv_general_dilated(
        x, mod.weight,
        window_strides=(mod.tubelet_size, mod.patch_size[0], mod.patch_size[1]),
        padding="VALID",
        dimension_numbers=("NCDHW", "OIDHW", "NCDHW"))
    ref_conv = ref_conv + mod.bias.reshape(1, -1, 1, 1, 1)
    ref = ref_conv.reshape(B, mod.embed_dim, -1).transpose(0, 2, 1)

    assert jnp.allclose(y, ref, atol=5e-3, rtol=5e-3), (
        "max abs diff = " + str(float(jnp.max(jnp.abs(y - ref)))))
    print("KERNEL_OK")
</pallas_src>

<mosaic_0001>
module attributes {stable_mosaic.version = 11 : i64} {
  func.func @_patch_embed_matmul_kernel(%arg0: i32, %arg1: i32, %arg2: i32, %arg3: memref<16x384xf32, #tpu.memory_space<vmem>>, %arg4: memref<384x128xf32, #tpu.memory_space<vmem>>, %arg5: memref<1x128xf32, #tpu.memory_space<vmem>>, %arg6: memref<16x128xf32, #tpu.memory_space<vmem>>, %arg7: memref<16x128xf32, #tpu.memory_space<vmem>>) attributes {dimension_semantics = [#tpu.dimension_semantics<parallel>, #tpu.dimension_semantics<parallel>, #tpu.dimension_semantics<arbitrary>], iteration_bounds = array<i64: 1, 1, 1>, scalar_prefetch = 0 : i64, scratch_operands = 1 : i64, tpu.core_type = #tpu.core_type<tc>, window_params = [{transform_indices = @transform_0, window_bounds = array<i64: 16, 384>}, {transform_indices = @transform_1, window_bounds = array<i64: 384, 128>}, {transform_indices = @transform_2, window_bounds = array<i64: 1, 128>}, {transform_indices = @transform_3, window_bounds = array<i64: 16, 128>}]} {
    %c0_i32 = arith.constant 0 : i32
    %0 = arith.cmpi eq, %arg2, %c0_i32 : i32
    %1 = arith.extui %0 : i1 to i32
    %c0_i32_0 = arith.constant 0 : i32
    %2 = arith.cmpi ne, %1, %c0_i32_0 : i32
    scf.if %2 {
      %cst_10 = arith.constant 0.000000e+00 : f32
      %12 = vector.broadcast %cst_10 : f32 to vector<16x128xf32>
      %c0_11 = arith.constant 0 : index
      %c0_12 = arith.constant 0 : index
      %13 = vector.load %arg7[%c0_11, %c0_12] : memref<16x128xf32, #tpu.memory_space<vmem>>, vector<16x128xf32>
      tpu.vector_store %arg7[%c0_11, %c0_12], %12 {strides = array<i32>} : memref<16x128xf32, #tpu.memory_space<vmem>>, vector<16x128xf32>,
    } else {
    }
    %c0 = arith.constant 0 : index
    %c0_1 = arith.constant 0 : index
    %3 = vector.load %arg7[%c0, %c0_1] : memref<16x128xf32, #tpu.memory_space<vmem>>, vector<16x128xf32>
    %c0_2 = arith.constant 0 : index
    %c0_3 = arith.constant 0 : index
    %4 = vector.load %arg3[%c0_2, %c0_3] : memref<16x384xf32, #tpu.memory_space<vmem>>, vector<16x384xf32>
    %c0_4 = arith.constant 0 : index
    %c0_5 = arith.constant 0 : index
    %5 = vector.load %arg4[%c0_4, %c0_5] : memref<384x128xf32, #tpu.memory_space<vmem>>, vector<384x128xf32>
    %cst = arith.constant dense<0.000000e+00> : vector<16x128xf32>
    %6 = tpu.matmul %4, %5, %cst {dimension_numbers = #tpu.dot_dimension_numbers<[1], [0], [0], [1], [0, 0, 1, 1], [], []>} : vector<16x384xf32>, vector<384x128xf32>, vector<16x128xf32> -> vector<16x128xf32>
    %7 = arith.addf %3, %6 : vector<16x128xf32>
    %c0_6 = arith.constant 0 : index
    %c0_7 = arith.constant 0 : index
    %8 = vector.load %arg7[%c0_6, %c0_7] : memref<16x128xf32, #tpu.memory_space<vmem>>, vector<16x128xf32>
    tpu.vector_store %arg7[%c0_6, %c0_7], %7 {strides = array<i32>} : memref<16x128xf32, #tpu.memory_space<vmem>>, vector<16x128xf32>,
    %c0_i32_8 = arith.constant 0 : i32
    %9 = arith.cmpi eq, %arg2, %c0_i32_8 : i32
    %10 = arith.extui %9 : i1 to i32
    %c0_i32_9 = arith.constant 0 : i32
    %11 = arith.cmpi ne, %10, %c0_i32_9 : i32
    scf.if %11 {
      %c0_10 = arith.constant 0 : index
      %c0_11 = arith.constant 0 : index
      %12 = vector.load %arg7[%c0_10, %c0_11] : memref<16x128xf32, #tpu.memory_space<vmem>>, vector<16x128xf32>
      %c0_12 = arith.constant 0 : index
      %c0_13 = arith.constant 0 : index
      %13 = vector.load %arg5[%c0_12, %c0_13] : memref<1x128xf32, #tpu.memory_space<vmem>>, vector<1x128xf32>
      %14 = vector.broadcast %13 : vector<1x128xf32> to vector<16x128xf32>
      %15 = arith.addf %12, %14 : vector<16x128xf32>
      %c0_14 = arith.constant 0 : index
      %c0_15 = arith.constant 0 : index
      %16 = vector.load %arg6[%c0_14, %c0_15] : memref<16x128xf32, #tpu.memory_space<vmem>>, vector<16x128xf32>
      tpu.vector_store %arg6[%c0_14, %c0_15], %15 {strides = array<i32>} : memref<16x128xf32, #tpu.memory_space<vmem>>, vector<16x128xf32>,
    } else {
    }
    return
  }
  func.func @transform_0(%arg0: i32, %arg1: i32, %arg2: i32) -> (i32, i32) {
    %c0_i32 = arith.constant 0 : i32
    return %arg0, %arg2 : i32, i32
  }
  func.func @transform_1(%arg0: i32, %arg1: i32, %arg2: i32) -> (i32, i32) {
    %c0_i32 = arith.constant 0 : i32
    return %arg2, %arg1 : i32, i32
  }
  func.func @transform_2(%arg0: i32, %arg1: i32, %arg2: i32) -> (i32, i32) {
    %c0_i32 = arith.constant 0 : i32
    %c0_i32_0 = arith.constant 0 : i32
    return %c0_i32, %arg1 : i32, i32
  }
  func.func @transform_3(%arg0: i32, %arg1: i32, %arg2: i32) -> (i32, i32) {
    %c0_i32 = arith.constant 0 : i32
    return %arg0, %arg1 : i32, i32
  }
}

</mosaic_0001>

<llo_original>
// kernel: tpu_custom_call.1
$region0: #{tpu_custom_call.1}
  #allocation0 [shape = 'u32[]', space=smem, size = 0x4, offset = 0x4, fixed_abs, tag = 'smem constant byte address 0x4 - core index']
  #allocation1 [shape = 'u32[144,128]{1,0:T(1,128)}', space=vmem, size = 0x12000, scoped, tag = 'internal scratch']
  #allocation2 [shape = 'f32[16,128]{1,0:T(8,128)}', space=vmem, size = 0x2000, scoped, tag = 'scratch operand']
  %s0 = inlined_call_operand.hbm [shape: f32[16,384], index: 0, kind: input, shape index: {}]
  %s1 = inlined_call_operand.hbm [shape: f32[384,128], index: 1, kind: input, shape index: {}]
  %s2 = inlined_call_operand.vmem [shape: f32[1,128], index: 2, kind: input, shape index: {}]
  %s3 = inlined_call_operand.hbm [shape: f32[16,128], index: 3, kind: output, shape index: {}]
  %s4 = sld [smem:[#allocation0]]
  $region38: #{tpu_custom_call.1} parent=0
    _
  %s6 = ssub.s32 1, %s4
  %s7 = scalar_select 0, %s6, %s4
  $region1: #{tpu_custom_call.1} parent=0
    #allocation3 [shape = 'u8[24576]{0}', space=vmem, size = 0x6000, scoped, tag = 'input window, operand 0, single buffered']
    #allocation4 [shape = 's32[1]{0}', space=sflag, size = 0x4, scoped, tag = 'scoped memory for tpu_custom_call.1']
    #allocation5 [shape = 's32[1]{0}', space=sflag, size = 0x4, scoped, tag = 'scoped memory for tpu_custom_call.1']
    #allocation6 [shape = 'u8[196608]{0}', space=vmem, size = 0x30000, scoped, tag = 'input window, operand 1, single buffered']
    #allocation7 [shape = 's32[1]{0}', space=sflag, size = 0x4, scoped, tag = 'scoped memory for tpu_custom_call.1']
    #allocation8 [shape = 'u8[8192]{0}', space=vmem, size = 0x2000, scoped, tag = 'output window, operand 0, single buffered']
    %8 = vsyncpa [#allocation4], 0
    %9 = vsyncpa [#allocation7], 0
    %10 = vsyncpa [#allocation5], 0
    // Predicated region
    $region2: #{tpu_custom_call.1} parent=1 // pred_check
      _
    $region3: #{tpu_custom_call.1} parent=1 // pred_check_branch
      %12 = sbr.rel (0) target = $region5
    $region4: #{tpu_custom_call.1} parent=1 // pred_region
      %s14 = ssub.s32 768, 768
      %15 = vsyncadd [#allocation4], %s14
      %s16 = sshll.u32 [#allocation3], 4
      %s17 = int_to_ptr.vmem [resolvable:$true] %s16
      %22 = dma.hbm_to_vmem [thread:$0]  %s0, 768, %s17, [#allocation4], 384, 384, 24
    $region5: #{tpu_custom_call.1} parent=1 // pred_fallthru
      _
    // Predicated region
    $region6: #{tpu_custom_call.1} parent=1 // pred_check
      _
    $region7: #{tpu_custom_call.1} parent=1 // pred_check_branch
      %24 = sbr.rel (0) target = $region9
    $region8: #{tpu_custom_call.1} parent=1 // pred_region
      %s26 = ssub.s32 6144, 6144
      %27 = vsyncadd [#allocation7], %s26
      %s28 = sshll.u32 [#allocation6], 4
      %s29 = int_to_ptr.vmem [resolvable:$true] %s28
      %34 = dma.hbm_to_vmem [thread:$0]  %s1, 6144, %s29, [#allocation7], 128, 128, 8
    $region9: #{tpu_custom_call.1} parent=1 // pred_fallthru
      _
    // Predicated region
    $region10: #{tpu_custom_call.1} parent=1 // pred_check
      _
    $region11: #{tpu_custom_call.1} parent=1 // pred_check_branch
      %36 = sbr.rel (0) target = $region13
    $region12: #{tpu_custom_call.1} parent=1 // pred_region
      _
    $region13: #{tpu_custom_call.1} parent=1 // pred_fallthru
      _
    // Predicated region
    $region14: #{tpu_custom_call.1} parent=1 // pred_check
      _
    $region15: #{tpu_custom_call.1} parent=1 // pred_check_branch
      %38 = sbr.rel (0) target = $region17
    $region16: #{tpu_custom_call.1} parent=1 // pred_region
      %39 = dma.done [#allocation4], 768
    $region17: #{tpu_custom_call.1} parent=1 // pred_fallthru
      _
    // Predicated region
    $region18: #{tpu_custom_call.1} parent=1 // pred_check
      _
    $region19: #{tpu_custom_call.1} parent=1 // pred_check_branch
      %41 = sbr.rel (0) target = $region21
    $region20: #{tpu_custom_call.1} parent=1 // pred_region
      %42 = dma.done [#allocation7], 6144
    $region21: #{tpu_custom_call.1} parent=1 // pred_fallthru
      _
    %p43 = scmp.eq.s32.totalorder 0, 0
    // Predicated region
    $region22: #{tpu_custom_call.1} parent=1 // pred_check
      %p44 = pneg %p43
    $region23: #{tpu_custom_call.1} parent=1 // pred_check_branch
      %46 = sbr.rel (%p44) target = $region25
    $region24: #{tpu_custom_call.1} parent=1 // pred_region
      %47 = vst [vmem:[#allocation2] sm:$0xff] 0.0
      %48 = vst [vmem:[#allocation2 + $0x8] sm:$0xff] 0.0
    $region25: #{tpu_custom_call.1} parent=1 // pred_fallthru
      _
    %v49 = vld [vmem:[#allocation2] sm:$0xff]
    %v50 = vld [vmem:[#allocation2 + $0x8] sm:$0xff]
    %v51 = vld [vmem:[#allocation3] sm:$0xff]
    %v52 = vld [vmem:[#allocation3 + $0x8] sm:$0xff]
    %v53 = vld [vmem:[#allocation3 + $0x10] sm:$0xff]
    %v54 = vld [vmem:[#allocation3 + $0x18] sm:$0xff]
    %v55 = vld [vmem:[#allocation3 + $0x20] sm:$0xff]
    %v56 = vld [vmem:[#allocation3 + $0x28] sm:$0xff]
    %v57 = vld [vmem:[#allocation6] sm:$0xff]
    %v58 = vld [vmem:[#allocation6 + $0x8] sm:$0xff]
    %v59 = vld [vmem:[#allocation6 + $0x10] sm:$0xff]
    %v60 = vld [vmem:[#allocation6 + $0x18] sm:$0xff]
    %v61 = vld [vmem:[#allocation6 + $0x20] sm:$0xff]
    %v62 = vld [vmem:[#allocation6 + $0x28] sm:$0xff]
    %v63 = vld [vmem:[#allocation6 + $0x30] sm:$0xff]
    %v64 = vld [vmem:[#allocation6 + $0x38] sm:$0xff]
    %v65 = vld [vmem:[#allocation6 + $0x40] sm:$0xff]
    %v66 = vld [vmem:[#allocation6 + $0x48] sm:$0xff]
    %v67 = vld [vmem:[#allocation6 + $0x50] sm:$0xff]
    %v68 = vld [vmem:[#allocation6 + $0x58] sm:$0xff]
    %v69 = vld [vmem:[#allocation6 + $0x60] sm:$0xff]
    %v70 = vld [vmem:[#allocation6 + $0x68] sm:$0xff]
    %v71 = vld [vmem:[#allocation6 + $0x70] sm:$0xff]
    %v72 = vld [vmem:[#allocation6 + $0x78] sm:$0xff]
    %v73 = vld [vmem:[#allocation6 + $0x80] sm:$0xff]
    %v74 = vld [vmem:[#allocation6 + $0x88] sm:$0xff]
    %v75 = vld [vmem:[#allocation6 + $0x90] sm:$0xff]
    %v76 = vld [vmem:[#allocation6 + $0x98] sm:$0xff]
    %v77 = vld [vmem:[#allocation6 + $0xa0] sm:$0xff]
    %v78 = vld [vmem:[#allocation6 + $0xa8] sm:$0xff]
    %v79 = vld [vmem:[#allocation6 + $0xb0] sm:$0xff]
    %v80 = vld [vmem:[#allocation6 + $0xb8] sm:$0xff]
    %v81 = vld [vmem:[#allocation6 + $0xc0] sm:$0xff]
    %v82 = vld [vmem:[#allocation6 + $0xc8] sm:$0xff]
    %v83 = vld [vmem:[#allocation6 + $0xd0] sm:$0xff]
    %v84 = vld [vmem:[#allocation6 + $0xd8] sm:$0xff]
    %v85 = vld [vmem:[#allocation6 + $0xe0] sm:$0xff]
    %v86 = vld [vmem:[#allocation6 + $0xe8] sm:$0xff]
    %v87 = vld [vmem:[#allocation6 + $0xf0] sm:$0xff]
    %v88 = vld [vmem:[#allocation6 + $0xf8] sm:$0xff]
    %v89 = vld [vmem:[#allocation6 + $0x100] sm:$0xff]
    %v90 = vld [vmem:[#allocation6 + $0x108] sm:$0xff]
    %v91 = vld [vmem:[#allocation6 + $0x110] sm:$0xff]
    %v92 = vld [vmem:[#allocation6 + $0x118] sm:$0xff]
    %v93 = vld [vmem:[#allocation6 + $0x120] sm:$0xff]
    %v94 = vld [vmem:[#allocation6 + $0x128] sm:$0xff]
    %v95 = vld [vmem:[#allocation6 + $0x130] sm:$0xff]
    %v96 = vld [vmem:[#allocation6 + $0x138] sm:$0xff]
    %v97 = vld [vmem:[#allocation6 + $0x140] sm:$0xff]
    %v98 = vld [vmem:[#allocation6 + $0x148] sm:$0xff]
    %v99 = vld [vmem:[#allocation6 + $0x150] sm:$0xff]
    %v100 = vld [vmem:[#allocation6 + $0x158] sm:$0xff]
    %v101 = vld [vmem:[#allocation6 + $0x160] sm:$0xff]
    %v102 = vld [vmem:[#allocation6 + $0x168] sm:$0xff]
    %v103 = vld [vmem:[#allocation6 + $0x170] sm:$0xff]
    %v104 = vld [vmem:[#allocation6 + $0x178] sm:$0xff]
    %105 = vmatprep.subr.mxu0 0.0
    %106 = vmatpush1.msra.mxu0 %v72
    %107 = vmatprep.subr.mxu0 0.0
    %108 = vmatpush1.msra.mxu0 %v71
    %109 = vmatprep.subr.mxu0 0.0
    %110 = vmatpush1.msra.mxu0 %v70
    %111 = vmatprep.subr.mxu0 0.0
    %112 = vmatpush1.msra.mxu0 %v69
    %113 = vmatprep.subr.mxu0 0.0
    %114 = vmatpush1.msra.mxu0 %v68
    %115 = vmatprep.subr.mxu0 0.0
    %116 = vmatpush1.msra.mxu0 %v67
    %117 = vmatprep.subr.mxu0 0.0
    %118 = vmatpush1.msra.mxu0 %v66
    %119 = vmatprep.subr.mxu0 0.0
    %120 = vmatpush1.msra.mxu0 %v65
    %121 = vmatprep.subr.mxu0 0.0
    %122 = vmatpush1.msra.mxu0 %v64
    %123 = vmatprep.subr.mxu0 0.0
    %124 = vmatpush1.msra.mxu0 %v63
    %125 = vmatprep.subr.mxu0 0.0
    %126 = vmatpush1.msra.mxu0 %v62
    %127 = vmatprep.subr.mxu0 0.0
    %128 = vmatpush1.msra.mxu0 %v61
    %129 = vmatprep.subr.mxu0 0.0
    %130 = vmatpush1.msra.mxu0 %v60
    %131 = vmatprep.subr.mxu0 0.0
    %132 = vmatpush1.msra.mxu0 %v59
    %133 = vmatprep.subr.mxu0 0.0
    %134 = vmatpush1.msra.mxu0 %v58
    %135 = vmatprep.subr.mxu0 0.0
    %136 = vmatpush1.msra.mxu0 %v57
    %137 = vmatprep.subr.mxu0 0.0
    %138 = vmatpush2.msra.mxu0 %v88
    %139 = vmatprep.subr.mxu0 0.0
    %140 = vmatpush2.msra.mxu0 %v87
    %141 = vmatprep.subr.mxu0 0.0
    %142 = vmatpush2.msra.mxu0 %v86
    %143 = vmatprep.subr.mxu0 0.0
    %144 = vmatpush2.msra.mxu0 %v85
    %145 = vmatprep.subr.mxu0 0.0
    %146 = vmatpush2.msra.mxu0 %v84
    %147 = vmatprep.subr.mxu0 0.0
    %148 = vmatpush2.msra.mxu0 %v83
    %149 = vmatprep.subr.mxu0 0.0
    %150 = vmatpush2.msra.mxu0 %v82
    %151 = vmatprep.subr.mxu0 0.0
    %152 = vmatpush2.msra.mxu0 %v81
    %153 = vmatprep.subr.mxu0 0.0
    %154 = vmatpush2.msra.mxu0 %v80
    %155 = vmatprep.subr.mxu0 0.0
    %156 = vmatpush2.msra.mxu0 %v79
    %157 = vmatprep.subr.mxu0 0.0
    %158 = vmatpush2.msra.mxu0 %v78
    %159 = vmatprep.subr.mxu0 0.0
    %160 = vmatpush2.msra.mxu0 %v77
    %161 = vmatprep.subr.mxu0 0.0
    %162 = vmatpush2.msra.mxu0 %v76
    %163 = vmatprep.subr.mxu0 0.0
    %164 = vmatpush2.msra.mxu0 %v75
    %165 = vmatprep.subr.mxu0 0.0
    %166 = vmatpush2.msra.mxu0 %v74
    %167 = vmatprep.subr.mxu0 0.0
    %168 = vmatpush2.msra.mxu0 %v73
    %169 = vmatprep.mubr.f32.mxu0 %v52
    %170 = vmatmul.mubr.f32.gmra.mxu0 %v51
    %v171 = vpop.f32.mrf.mxu0
    %v172 = vadd.f32 0.0, %v171
    %v173 = vpop.f32.mrf.mxu0
    %174 = vmatprep.mubr.f32.mxu0 %v55
    %175 = vmatmul.mubr.f32.gmra.mxu0 %v54
    %v176 = vpop.f32.mrf.mxu0
    %v177 = vadd.f32 0.0, %v176
    %v178 = vpop.f32.mrf.mxu0
    %179 = vdwg.mxu0
    %180 = vmatprep.subr.mxu0 0.0
    %181 = vmatpush1.msra.mxu0 %v104
    %182 = vmatprep.subr.mxu0 0.0
    %183 = vmatpush1.msra.mxu0 %v103
    %184 = vmatprep.subr.mxu0 0.0
    %185 = vmatpush1.msra.mxu0 %v102
    %186 = vmatprep.subr.mxu0 0.0
    %187 = vmatpush1.msra.mxu0 %v101
    %188 = vmatprep.subr.mxu0 0.0
    %189 = vmatpush1.msra.mxu0 %v100
    %190 = vmatprep.subr.mxu0 0.0
    %191 = vmatpush1.msra.mxu0 %v99
    %192 = vmatprep.subr.mxu0 0.0
    %193 = vmatpush1.msra.mxu0 %v98
    %194 = vmatprep.subr.mxu0 0.0
    %195 = vmatpush1.msra.mxu0 %v97
    %196 = vmatprep.subr.mxu0 0.0
    %197 = vmatpush1.msra.mxu0 %v96
    %198 = vmatprep.subr.mxu0 0.0
    %199 = vmatpush1.msra.mxu0 %v95
    %200 = vmatprep.subr.mxu0 0.0
    %201 = vmatpush1.msra.mxu0 %v94
    %202 = vmatprep.subr.mxu0 0.0
    %203 = vmatpush1.msra.mxu0 %v93
    %204 = vmatprep.subr.mxu0 0.0
    %205 = vmatpush1.msra.mxu0 %v92
    %206 = vmatprep.subr.mxu0 0.0
    %207 = vmatpush1.msra.mxu0 %v91
    %208 = vmatprep.subr.mxu0 0.0
    %209 = vmatpush1.msra.mxu0 %v90
    %210 = vmatprep.subr.mxu0 0.0
    %211 = vmatpush1.msra.mxu0 %v89
    %212 = vmatprep.subr.mxu0 0.0
    %213 = vmatpush2.msra.mxu0 0.0
    %214 = vmatprep.subr.mxu0 0.0
    %215 = vmatpush2.msra.mxu0 0.0
    %216 = vmatprep.subr.mxu0 0.0
    %217 = vmatpush2.msra.mxu0 0.0
    %218 = vmatprep.subr.mxu0 0.0
    %219 = vmatpush2.msra.mxu0 0.0
    %220 = vmatprep.subr.mxu0 0.0
    %221 = vmatpush2.msra.mxu0 0.0
    %222 = vmatprep.subr.mxu0 0.0
    %223 = vmatpush2.msra.mxu0 0.0
    %224 = vmatprep.subr.mxu0 0.0
    %225 = vmatpush2.msra.mxu0 0.0
    %226 = vmatprep.subr.mxu0 0.0
    %227 = vmatpush2.msra.mxu0 0.0
    %228 = vmatprep.subr.mxu0 0.0
    %229 = vmatpush2.msra.mxu0 0.0
    %230 = vmatprep.subr.mxu0 0.0
    %231 = vmatpush2.msra.mxu0 0.0
    %232 = vmatprep.subr.mxu0 0.0
    %233 = vmatpush2.msra.mxu0 0.0
    %234 = vmatprep.subr.mxu0 0.0
    %235 = vmatpush2.msra.mxu0 0.0
    %236 = vmatprep.subr.mxu0 0.0
    %237 = vmatpush2.msra.mxu0 0.0
    %238 = vmatprep.subr.mxu0 0.0
    %239 = vmatpush2.msra.mxu0 0.0
    %240 = vmatprep.subr.mxu0 0.0
    %241 = vmatpush2.msra.mxu0 0.0
    %242 = vmatprep.subr.mxu0 0.0
    %243 = vmatpush2.msra.mxu0 0.0
    %244 = vmatprep.mubr.f32.mxu0 0.0
    %245 = vmatmul.mubr.f32.gmra.mxu0 %v53
    %v246 = vpop.f32.mrf.mxu0
    %v247 = vadd.f32 %v172, %v246
    %v248 = vpop.f32.mrf.mxu0
    %249 = vmatprep.mubr.f32.mxu0 0.0
    %250 = vmatmul.mubr.f32.gmra.mxu0 %v56
    %v251 = vpop.f32.mrf.mxu0
    %v252 = vadd.f32 %v177, %v251
    %v253 = vpop.f32.mrf.mxu0
    %254 = vdwg.mxu0
    %v255 = vadd.f32 %v49, %v247
    %v256 = vadd.f32 %v50, %v252
    %257 = vst [vmem:[#allocation2] sm:$0xff] %v255
    %258 = vst [vmem:[#allocation2 + $0x8] sm:$0xff] %v256
    // Predicated region
    $region26: #{tpu_custom_call.1} parent=1 // pred_check
      %p259 = pneg %p43
    $region27: #{tpu_custom_call.1} parent=1 // pred_check_branch
      %261 = sbr.rel (%p259) target = $region29
    $region28: #{tpu_custom_call.1} parent=1 // pred_region
      %v262 = vld [vmem:[#allocation2] sm:$0xff]
      %v263 = vld [vmem:[#allocation2 + $0x8] sm:$0xff]
      %v264 = vld [vmem:[%s2] sm:$0x1]
      %v266 = vlaneseq
      %v267 = vshrl.u32 %v266, 7
      %v268 = vsub.s32 0, %v267
      %v269 = vrot.slane %v264, %v268
      %v271 = vadd.f32 %v262, %v269
      %v272 = vadd.f32 %v263, %v269
      %273 = vst [vmem:[#allocation8] sm:$0xff] %v271
      %274 = vst [vmem:[#allocation8 + $0x8] sm:$0xff] %v272
    $region29: #{tpu_custom_call.1} parent=1 // pred_fallthru
      _
    // Predicated region
    $region30: #{tpu_custom_call.1} parent=1 // pred_check
      _
    $region31: #{tpu_custom_call.1} parent=1 // pred_check_branch
      %276 = sbr.rel (0) target = $region33
    $region32: #{tpu_custom_call.1} parent=1 // pred_region
      %s278 = ssub.s32 256, 256
      %279 = vsyncadd [#allocation5], %s278
      %s280 = sshll.u32 [#allocation8], 4
      %s281 = int_to_ptr.vmem [resolvable:$true] %s280
      %286 = dma.vmem_to_hbm [thread:$0]  %s281, 256, %s3, [#allocation5], 128, 128, 8
    $region33: #{tpu_custom_call.1} parent=1 // pred_fallthru
      _
    // Predicated region
    $region34: #{tpu_custom_call.1} parent=1 // pred_check
      _
    $region35: #{tpu_custom_call.1} parent=1 // pred_check_branch
      %288 = sbr.rel (0) target = $region37
    $region36: #{tpu_custom_call.1} parent=1 // pred_region
      %289 = dma.done [#allocation5], 256
    $region37: #{tpu_custom_call.1} parent=1 // pred_fallthru
      _
    %290 = vsyncpa [#allocation4], 1
    %291 = vsyncpa [#allocation7], 1
    %292 = vsyncpa [#allocation5], 1

</llo_original>
